<compile_context>
chip_gen: v7x
topology: tpu7x:2x2x1
jax: 0.10.0
libtpu: 0.0.40
codegen_flags: <defaults>
</compile_context>

<pallas_src>
import functools
import math

import jax
import jax.numpy as jnp
from jax.experimental import pallas as pl
from jax.experimental.pallas import tpu as pltpu


def _attn_kernel(q_ref, k_ref, v_ref, wq_ref, wk_ref, wv_ref, o_ref, *, scale):
    # Per-grid-step block = one batch element:
    #   q/k/v blocks: (1, S, E); weight blocks: (E, D); output block: (1, S, D)
    q_in = q_ref[0]                      # (S, E), input dtype (f32 or bf16)
    k_in = k_ref[0]
    v_in = v_ref[0]
    wq = wq_ref[...]                     # (E, D)
    wk = wk_ref[...]
    wv = wv_ref[...]
    cd = q_in.dtype                      # MXU feed dtype == input dtype

    # Linear projections (no bias): plain 2-D MXU matmuls, f32 accumulation.
    q = jnp.dot(q_in, wq, preferred_element_type=jnp.float32)   # (S, D)
    k = jnp.dot(k_in, wk, preferred_element_type=jnp.float32)
    v = jnp.dot(v_in, wv, preferred_element_type=jnp.float32)

    # Fold 1/sqrt(d_k) into q: O(S*D) multiplies instead of O(S*S) divides.
    qc = (q * scale).astype(cd)
    kc = k.astype(cd)
    vc = v.astype(cd)

    # scores = q @ k^T without materializing k^T: contract the trailing
    # feature dims of both operands directly (no XLU transpose round-trip).
    scores = jnp.einsum("qd,kd->qk", qc, kc,
                        preferred_element_type=jnp.float32)      # (S, S)

    # Numerically stable softmax over the key axis, kept in f32 on every chip
    # generation (v5e VPU/EUP have no bf16).
    # NOTE: with tiny S (=8) the score vregs are mostly empty lanes; this
    # resolves itself once S >= 128, so no special packing is done here.
    scores = scores - jnp.max(scores, axis=-1, keepdims=True)
    p = jnp.exp(scores)
    # EUP approximate reciprocal (otherwise-idle slot) instead of a VPU divide.
    inv_l = pl.reciprocal(jnp.sum(p, axis=-1, keepdims=True), approx=True)
    p = p * inv_l

    out = jnp.einsum("qk,kd->qd", p.astype(cd), vc,
                     preferred_element_type=jnp.float32)         # (S, D)
    o_ref[0] = out.astype(o_ref.dtype)


def prepare_weights(wq, wk, wv, compute_dtype=jnp.float32):
    """One-time parameter prep OUTSIDE the per-call path.

    wq/wk/wv: nn.Linear-style weights of shape (D, E). Returns transposed
    (E, D) weights cast to `compute_dtype` (use jnp.bfloat16 for the bf16
    MXU-feed path).
    """
    return tuple(w.T.astype(compute_dtype) for w in (wq, wk, wv))


@jax.jit
def scaled_dot_product_attention(query, key, value, wq_t, wk_t, wv_t):
    """query/key/value: (B, S, E); w*_t: (E, D) (pre-transposed, pre-cast).

    Inputs may be f32 or bf16; matmuls accumulate in f32 either way and the
    output is f32.  No padding, casting, or slicing happens per call.
    """
    B, S, E = query.shape
    E_w, D = wq_t.shape
    assert E_w == E

    # d_k in the reference is the projected feature size (d_model == D).
    scale = 1.0 / math.sqrt(D)

    kernel = functools.partial(_attn_kernel, scale=scale)

    in_bytes = jnp.dtype(query.dtype).itemsize
    w_bytes = jnp.dtype(wq_t.dtype).itemsize
    cost = pl.CostEstimate(
        flops=2 * B * S * E * D * 3 + 2 * B * S * S * D * 2,
        transcendentals=B * S * S,
        bytes_accessed=(3 * B * S * E * in_bytes
                        + 3 * E * D * w_bytes
                        + B * S * D * 4),
    )

    return pl.pallas_call(
        kernel,
        out_shape=jax.ShapeDtypeStruct((B, S, D), jnp.float32),
        grid_spec=pltpu.PrefetchScalarGridSpec(
            num_scalar_prefetch=0,
            grid=(B,),  # "parallel": shards across both TCs on v7x
            in_specs=[
                pl.BlockSpec((1, S, E), lambda b: (b, 0, 0)),   # query
                pl.BlockSpec((1, S, E), lambda b: (b, 0, 0)),   # key
                pl.BlockSpec((1, S, E), lambda b: (b, 0, 0)),   # value
                pl.BlockSpec((E, D), lambda b: (0, 0)),         # w_q^T (revisited)
                pl.BlockSpec((E, D), lambda b: (0, 0)),         # w_k^T
                pl.BlockSpec((E, D), lambda b: (0, 0)),         # w_v^T
            ],
            out_specs=pl.BlockSpec((1, S, D), lambda b: (b, 0, 0)),
        ),
        compiler_params=pltpu.CompilerParams(
            dimension_semantics=("parallel",),
        ),
        cost_estimate=cost,
    )(query, key, value, wq_t, wk_t, wv_t)


def _reference(query, key, value, wq_t, wk_t, wv_t):
    q = query @ wq_t
    k = key @ wk_t
    v = value @ wv_t
    d_k = q.shape[-1]
    s = jnp.einsum("bqd,bkd->bqk", q, k) / math.sqrt(d_k)
    p = jax.nn.softmax(s, axis=-1)
    return jnp.einsum("bqk,bkd->bqd", p, v)


if __name__ == "__main__":
    # Small shapes consistent with the module's forward.
    B, S, E, D = 2, 8, 32, 32  # batch, seq, embedding_dim, d_model

    key0 = jax.random.PRNGKey(0)
    kq, kk, kv, kwq, kwk, kwv = jax.random.split(key0, 6)

    query = jax.random.normal(kq, (B, S, E), dtype=jnp.float32)
    key_in = jax.random.normal(kk, (B, S, E), dtype=jnp.float32)
    value = jax.random.normal(kv, (B, S, E), dtype=jnp.float32)

    # nn.Linear-style init: weight ~ U(-1/sqrt(E), 1/sqrt(E)), shape (D, E).
    bound = 1.0 / math.sqrt(E)
    wq = jax.random.uniform(kwq, (D, E), jnp.float32, -bound, bound)
    wk = jax.random.uniform(kwk, (D, E), jnp.float32, -bound, bound)
    wv = jax.random.uniform(kwv, (D, E), jnp.float32, -bound, bound)

    # One-time parameter prep (outside the per-call path).
    wq_t, wk_t, wv_t = prepare_weights(wq, wk, wv, jnp.float32)
    wq_b, wk_b, wv_b = prepare_weights(wq, wk, wv, jnp.bfloat16)

    ref = _reference(query, key_in, value, wq_t, wk_t, wv_t)

    # f32 path.
    out = scaled_dot_product_attention(query, key_in, value, wq_t, wk_t, wv_t)
    out = jax.block_until_ready(out)
    assert out.shape == (B, S, D)
    # Tolerance accounts for the EUP approximate reciprocal in softmax.
    assert jnp.allclose(out, ref, atol=2e-3, rtol=2e-3)

    # bf16 MXU-feed path (recommended on v5e/v6e/v7x): activations/weights are
    # cast BEFORE the pallas_call so the DMAs carry half the bytes.
    q_bf = query.astype(jnp.bfloat16)
    k_bf = key_in.astype(jnp.bfloat16)
    v_bf = value.astype(jnp.bfloat16)
    out_bf16 = scaled_dot_product_attention(q_bf, k_bf, v_bf, wq_b, wk_b, wv_b)
    out_bf16 = jax.block_until_ready(out_bf16)
    assert out_bf16.shape == (B, S, D)
    assert jnp.allclose(out_bf16, ref, atol=5e-2, rtol=5e-2)

    print("KERNEL_OK")
</pallas_src>

<mosaic_0001>
module attributes {stable_mosaic.version = 11 : i64} {
  func.func @_attn_kernel(%arg0: i32, %arg1: memref<1x8x32xf32, #tpu.memory_space<vmem>>, %arg2: memref<1x8x32xf32, #tpu.memory_space<vmem>>, %arg3: memref<1x8x32xf32, #tpu.memory_space<vmem>>, %arg4: memref<32x32xf32, #tpu.memory_space<vmem>>, %arg5: memref<32x32xf32, #tpu.memory_space<vmem>>, %arg6: memref<32x32xf32, #tpu.memory_space<vmem>>, %arg7: memref<1x8x32xf32, #tpu.memory_space<vmem>>) attributes {dimension_semantics = [#tpu.dimension_semantics<parallel>], iteration_bounds = array<i64: 2>, scalar_prefetch = 0 : i64, scratch_operands = 0 : i64, tpu.core_type = #tpu.core_type<tc>, window_params = [{transform_indices = @transform_0, window_bounds = array<i64: 1, 8, 32>}, {transform_indices = @transform_1, window_bounds = array<i64: 1, 8, 32>}, {transform_indices = @transform_2, window_bounds = array<i64: 1, 8, 32>}, {pipeline_mode = #tpu.pipeline_mode<synchronous>, transform_indices = @transform_3, window_bounds = array<i64: 32, 32>}, {pipeline_mode = #tpu.pipeline_mode<synchronous>, transform_indices = @transform_4, window_bounds = array<i64: 32, 32>}, {pipeline_mode = #tpu.pipeline_mode<synchronous>, transform_indices = @transform_5, window_bounds = array<i64: 32, 32>}, {transform_indices = @transform_6, window_bounds = array<i64: 1, 8, 32>}]} {
    %c0 = arith.constant 0 : index
    %c0_0 = arith.constant 0 : index
    %c0_1 = arith.constant 0 : index
    %0 = vector.load %arg1[%c0, %c0_0, %c0_1] : memref<1x8x32xf32, #tpu.memory_space<vmem>>, vector<1x8x32xf32>
    %1 = vector.shape_cast %0 : vector<1x8x32xf32> to vector<8x32xf32>
    %c0_2 = arith.constant 0 : index
    %c0_3 = arith.constant 0 : index
    %c0_4 = arith.constant 0 : index
    %2 = vector.load %arg2[%c0_2, %c0_3, %c0_4] : memref<1x8x32xf32, #tpu.memory_space<vmem>>, vector<1x8x32xf32>
    %3 = vector.shape_cast %2 : vector<1x8x32xf32> to vector<8x32xf32>
    %c0_5 = arith.constant 0 : index
    %c0_6 = arith.constant 0 : index
    %c0_7 = arith.constant 0 : index
    %4 = vector.load %arg3[%c0_5, %c0_6, %c0_7] : memref<1x8x32xf32, #tpu.memory_space<vmem>>, vector<1x8x32xf32>
    %5 = vector.shape_cast %4 : vector<1x8x32xf32> to vector<8x32xf32>
    %c0_8 = arith.constant 0 : index
    %c0_9 = arith.constant 0 : index
    %6 = vector.load %arg4[%c0_8, %c0_9] : memref<32x32xf32, #tpu.memory_space<vmem>>, vector<32x32xf32>
    %c0_10 = arith.constant 0 : index
    %c0_11 = arith.constant 0 : index
    %7 = vector.load %arg5[%c0_10, %c0_11] : memref<32x32xf32, #tpu.memory_space<vmem>>, vector<32x32xf32>
    %c0_12 = arith.constant 0 : index
    %c0_13 = arith.constant 0 : index
    %8 = vector.load %arg6[%c0_12, %c0_13] : memref<32x32xf32, #tpu.memory_space<vmem>>, vector<32x32xf32>
    %cst = arith.constant dense<0.000000e+00> : vector<8x32xf32>
    %9 = tpu.matmul %1, %6, %cst {dimension_numbers = #tpu.dot_dimension_numbers<[1], [0], [0], [1], [0, 0, 1, 1], [], []>} : vector<8x32xf32>, vector<32x32xf32>, vector<8x32xf32> -> vector<8x32xf32>
    %cst_14 = arith.constant dense<0.000000e+00> : vector<8x32xf32>
    %10 = tpu.matmul %3, %7, %cst_14 {dimension_numbers = #tpu.dot_dimension_numbers<[1], [0], [0], [1], [0, 0, 1, 1], [], []>} : vector<8x32xf32>, vector<32x32xf32>, vector<8x32xf32> -> vector<8x32xf32>
    %cst_15 = arith.constant dense<0.000000e+00> : vector<8x32xf32>
    %11 = tpu.matmul %5, %8, %cst_15 {dimension_numbers = #tpu.dot_dimension_numbers<[1], [0], [0], [1], [0, 0, 1, 1], [], []>} : vector<8x32xf32>, vector<32x32xf32>, vector<8x32xf32> -> vector<8x32xf32>
    %cst_16 = arith.constant 0.176776692 : f32
    %12 = vector.broadcast %cst_16 : f32 to vector<8x32xf32>
    %13 = arith.mulf %9, %12 : vector<8x32xf32>
    "tpu.trace_start"() <{level = 10 : i32, message = "qd,kd->qk"}> : () -> ()
    %cst_17 = arith.constant dense<0.000000e+00> : vector<8x8xf32>
    %14 = tpu.matmul %13, %10, %cst_17 {dimension_numbers = #tpu.dot_dimension_numbers<[1], [1], [0], [0], [0, 0, 1, 0], [], []>} : vector<8x32xf32>, vector<8x32xf32>, vector<8x8xf32> -> vector<8x8xf32>
    "tpu.trace_stop"() : () -> ()
    %cst_18 = arith.constant dense<0xFF800000> : vector<8xf32>
    %15 = vector.multi_reduction <maximumf>, %14, %cst_18 [1] : vector<8x8xf32> to vector<8xf32>
    %16 = vector.shape_cast %15 : vector<8xf32> to vector<8x1xf32>
    %17 = vector.broadcast %16 : vector<8x1xf32> to vector<8x8xf32>
    %18 = arith.subf %14, %17 : vector<8x8xf32>
    %19 = math.exp %18 : vector<8x8xf32>
    %cst_19 = arith.constant dense<0.000000e+00> : vector<8xf32>
    %20 = vector.multi_reduction <add>, %19, %cst_19 [1] : vector<8x8xf32> to vector<8xf32>
    %21 = vector.shape_cast %20 : vector<8xf32> to vector<8x1xf32>
    %22 = tpu.reciprocal %21 {approx = true} : vector<8x1xf32> -> vector<8x1xf32>
    %23 = vector.broadcast %22 : vector<8x1xf32> to vector<8x8xf32>
    %24 = arith.mulf %19, %23 : vector<8x8xf32>
    "tpu.trace_start"() <{level = 10 : i32, message = "qk,kd->qd"}> : () -> ()
    %cst_20 = arith.constant dense<0.000000e+00> : vector<8x32xf32>
    %25 = tpu.matmul %24, %11, %cst_20 {dimension_numbers = #tpu.dot_dimension_numbers<[1], [0], [0], [1], [0, 0, 1, 1], [], []>} : vector<8x8xf32>, vector<8x32xf32>, vector<8x32xf32> -> vector<8x32xf32>
    "tpu.trace_stop"() : () -> ()
    %c0_21 = arith.constant 0 : index
    %c0_22 = arith.constant 0 : index
    %c0_23 = arith.constant 0 : index
    %26 = vector.load %arg7[%c0_21, %c0_22, %c0_23] : memref<1x8x32xf32, #tpu.memory_space<vmem>>, vector<1x8x32xf32>
    %27 = vector.shape_cast %26 : vector<1x8x32xf32> to vector<8x32xf32>
    %28 = vector.shape_cast %25 : vector<8x32xf32> to vector<1x8x32xf32>
    tpu.vector_store %arg7[%c0_21, %c0_22, %c0_23], %28 {strides = array<i32>} : memref<1x8x32xf32, #tpu.memory_space<vmem>>, vector<1x8x32xf32>,
    return
  }
  func.func @transform_0(%arg0: i32) -> (i32, i32, i32) {
    %c0_i32 = arith.constant 0 : i32
    %c0_i32_0 = arith.constant 0 : i32
    %c0_i32_1 = arith.constant 0 : i32
    return %arg0, %c0_i32, %c0_i32_0 : i32, i32, i32
  }
  func.func @transform_1(%arg0: i32) -> (i32, i32, i32) {
    %c0_i32 = arith.constant 0 : i32
    %c0_i32_0 = arith.constant 0 : i32
    %c0_i32_1 = arith.constant 0 : i32
    return %arg0, %c0_i32, %c0_i32_0 : i32, i32, i32
  }
  func.func @transform_2(%arg0: i32) -> (i32, i32, i32) {
    %c0_i32 = arith.constant 0 : i32
    %c0_i32_0 = arith.constant 0 : i32
    %c0_i32_1 = arith.constant 0 : i32
    return %arg0, %c0_i32, %c0_i32_0 : i32, i32, i32
  }
  func.func @transform_3(%arg0: i32) -> (i32, i32) {
    %c0_i32 = arith.constant 0 : i32
    %c0_i32_0 = arith.constant 0 : i32
    %c0_i32_1 = arith.constant 0 : i32
    return %c0_i32, %c0_i32_0 : i32, i32
  }
  func.func @transform_4(%arg0: i32) -> (i32, i32) {
    %c0_i32 = arith.constant 0 : i32
    %c0_i32_0 = arith.constant 0 : i32
    %c0_i32_1 = arith.constant 0 : i32
    return %c0_i32, %c0_i32_0 : i32, i32
  }
  func.func @transform_5(%arg0: i32) -> (i32, i32) {
    %c0_i32 = arith.constant 0 : i32
    %c0_i32_0 = arith.constant 0 : i32
    %c0_i32_1 = arith.constant 0 : i32
    return %c0_i32, %c0_i32_0 : i32, i32
  }
  func.func @transform_6(%arg0: i32) -> (i32, i32, i32) {
    %c0_i32 = arith.constant 0 : i32
    %c0_i32_0 = arith.constant 0 : i32
    %c0_i32_1 = arith.constant 0 : i32
    return %arg0, %c0_i32, %c0_i32_0 : i32, i32, i32
  }
}

</mosaic_0001>

<llo_original>
// kernel: scaled_dot_product_attention.1
$region0: #{scaled_dot_product_attention.1}
  #allocation0 [shape = 'u32[]', space=smem, size = 0x4, offset = 0x4, fixed_abs, tag = 'smem constant byte address 0x4 - core index']
  #allocation1 [shape = 'u32[144,128]{1,0:T(1,128)}', space=vmem, size = 0x12000, scoped, tag = 'internal scratch']
  %s0 = inlined_call_operand.hbm [shape: f32[2,8,32], index: 0, kind: input, shape index: {}]
  %s1 = inlined_call_operand.hbm [shape: f32[2,8,32], index: 1, kind: input, shape index: {}]
  %s2 = inlined_call_operand.hbm [shape: f32[2,8,32], index: 2, kind: input, shape index: {}]
  %s3 = inlined_call_operand.hbm [shape: f32[32,32], index: 3, kind: input, shape index: {}]
  %s4 = inlined_call_operand.hbm [shape: f32[32,32], index: 4, kind: input, shape index: {}]
  %s5 = inlined_call_operand.hbm [shape: f32[32,32], index: 5, kind: input, shape index: {}]
  %s6 = inlined_call_operand.hbm [shape: f32[2,8,32], index: 6, kind: output, shape index: {}]
  %s7 = sld [smem:[#allocation0]]
  $region81: #{scaled_dot_product_attention.1} parent=0
    _
  %s9 = ssub.s32 1, %s7
  %s10 = scalar_select 0, %s9, %s7
  $region1: #{scaled_dot_product_attention.1} parent=0
    #allocation2 [shape = 'u8[8192]{0}', space=vmem, size = 0x2000, scoped, tag = 'input window, operand 0']
    #allocation3 [shape = 's32[2]{0}', space=sflag, size = 0x8, scoped, tag = 'scoped memory for scaled_dot_product_attention.1']
    #allocation4 [shape = 's32[2]{0}', space=sflag, size = 0x8, scoped, tag = 'scoped memory for scaled_dot_product_attention.1']
    #allocation5 [shape = 'u8[8192]{0}', space=vmem, size = 0x2000, scoped, tag = 'input window, operand 1']
    #allocation6 [shape = 's32[2]{0}', space=sflag, size = 0x8, scoped, tag = 'scoped memory for scaled_dot_product_attention.1']
    #allocation7 [shape = 'u8[8192]{0}', space=vmem, size = 0x2000, scoped, tag = 'input window, operand 2']
    #allocation8 [shape = 'u8[16384]{0}', space=vmem, size = 0x4000, scoped, tag = 'input window, operand 3, single buffered']
    #allocation9 [shape = 's32[1]{0}', space=sflag, size = 0x4, scoped, tag = 'scoped memory for scaled_dot_product_attention.1']
    #allocation10 [shape = 'u8[16384]{0}', space=vmem, size = 0x4000, scoped, tag = 'input window, operand 4, single buffered']
    #allocation11 [shape = 'u8[16384]{0}', space=vmem, size = 0x4000, scoped, tag = 'input window, operand 5, single buffered']
    #allocation12 [shape = 's32[1]{0}', space=sflag, size = 0x4, scoped, tag = 'scoped memory for scaled_dot_product_attention.1']
    #allocation13 [shape = 'u8[8192]{0}', space=vmem, size = 0x2000, scoped, tag = 'output window, operand 0']
    %11 = vsyncpa [#allocation3], 0
    %s12 = scalar_lea.sflag [#allocation3], 1
    %13 = vsyncpa %s12, 0
    %14 = vsyncpa [#allocation6], 0
    %s15 = scalar_lea.sflag [#allocation6], 1
    %16 = vsyncpa %s15, 0
    %17 = vsyncpa [#allocation9], 0
    %18 = vsyncpa [#allocation12], 0
    %19 = vsyncpa [#allocation4], 0
    %s20 = scalar_lea.sflag [#allocation4], 1
    %21 = vsyncpa %s20, 0
    loop: start=0, step=1, limit=4
    $region2: #{scaled_dot_product_attention.1} parent=1 // loop_pre_header
      _
    $region3: #{scaled_dot_product_attention.1} parent=1 // loop_header
      %s23 = sphi 0, %s27
      %p24 = scmp.ge.s32.totalorder %s23, 4
      %s33 = sphi 0, %s35
      %s36 = sphi 0, %s33
      %s37 = sphi 0, %s36
      %s53 = sphi 0, %s37
      %s59 = sphi 0, %s61
      %s62 = sphi 0, %s59
      %s63 = sphi 0, %s62
      %s79 = sphi 0, %s63
      %s85 = sphi 0, %s87
      %s88 = sphi 0, %s85
      %s89 = sphi 0, %s88
      %s105 = sphi 0, %s89
      %s109 = sphi 0, %s109
      %s111 = sphi 0, %s109
      %s112 = sphi 0, %s111
      %s126 = sphi 0, %s112
      %s130 = sphi 0, %s130
      %s132 = sphi 0, %s130
      %s133 = sphi 0, %s132
      %s147 = sphi 0, %s133
      %s151 = sphi 0, %s151
      %s153 = sphi 0, %s151
      %s154 = sphi 0, %s153
      %s168 = sphi 0, %s154
      %s174 = sphi 0, %s176
      %s177 = sphi 0, %s174
      %s178 = sphi 0, %s177
      %s194 = sphi 0, %s178
    $region4: #{scaled_dot_product_attention.1} parent=1 // loop_header_branch
      %26 = sbr.rel (%p24) target = $region8
    $region5: #{scaled_dot_product_attention.1} parent=1 // loop_body
      %s28 = ssub.s32 %s23, 1
      %s29 = ssub.s32 %s23, 2
      %s30 = sadd.s32 %s23, 1
      %s31 = ssub.s32 %s23, %s30
      %p32 = scmp.eq.s32.totalorder %s31, 0
      %s34 = sadd.s32 %s33, 1
      %s35 = scalar_select %p32, %s33, %s34
      %p38 = pneg %p32
      %p39 = scmp.eq.s32.totalorder %s23, 1
      %p40 = por %p38, %p39
      %p41 = scmp.ne.s32.totalorder %s33, %s36
      %p42 = scmp.eq.s32.totalorder %s23, 0
      %p43 = por %p41, %p42
      %p44 = scmp.ne.s32.totalorder %s33, %s36
      %p45 = scmp.eq.s32.totalorder %s28, 1
      %p46 = por %p44, %p45
      %p47 = scmp.ne.s32.totalorder %s36, %s37
      %p48 = scmp.eq.s32.totalorder %s28, 0
      %p49 = por %p47, %p48
      %p50 = scmp.ne.s32.totalorder %s36, %s37
      %p51 = scmp.eq.s32.totalorder %s29, 1
      %p52 = por %p50, %p51
      %p54 = scmp.ne.s32.totalorder %s37, %s53
      %p55 = scmp.eq.s32.totalorder %s29, 0
      %p56 = por %p54, %p55
      %s57 = ssub.s32 %s23, %s30
      %p58 = scmp.eq.s32.totalorder %s57, 0
      %s60 = sadd.s32 %s59, 1
      %s61 = scalar_select %p58, %s59, %s60
      %p64 = pneg %p58
      %p65 = scmp.eq.s32.totalorder %s23, 1
      %p66 = por %p64, %p65
      %p67 = scmp.ne.s32.totalorder %s59, %s62
      %p68 = scmp.eq.s32.totalorder %s23, 0
      %p69 = por %p67, %p68
      %p70 = scmp.ne.s32.totalorder %s59, %s62
      %p71 = scmp.eq.s32.totalorder %s28, 1
      %p72 = por %p70, %p71
      %p73 = scmp.ne.s32.totalorder %s62, %s63
      %p74 = scmp.eq.s32.totalorder %s28, 0
      %p75 = por %p73, %p74
      %p76 = scmp.ne.s32.totalorder %s62, %s63
      %p77 = scmp.eq.s32.totalorder %s29, 1
      %p78 = por %p76, %p77
      %p80 = scmp.ne.s32.totalorder %s63, %s79
      %p81 = scmp.eq.s32.totalorder %s29, 0
      %p82 = por %p80, %p81
      %s83 = ssub.s32 %s23, %s30
      %p84 = scmp.eq.s32.totalorder %s83, 0
      %s86 = sadd.s32 %s85, 1
      %s87 = scalar_select %p84, %s85, %s86
      %p90 = pneg %p84
      %p91 = scmp.eq.s32.totalorder %s23, 1
      %p92 = por %p90, %p91
      %p93 = scmp.ne.s32.totalorder %s85, %s88
      %p94 = scmp.eq.s32.totalorder %s23, 0
      %p95 = por %p93, %p94
      %p96 = scmp.ne.s32.totalorder %s85, %s88
      %p97 = scmp.eq.s32.totalorder %s28, 1
      %p98 = por %p96, %p97
      %p99 = scmp.ne.s32.totalorder %s88, %s89
      %p100 = scmp.eq.s32.totalorder %s28, 0
      %p101 = por %p99, %p100
      %p102 = scmp.ne.s32.totalorder %s88, %s89
      %p103 = scmp.eq.s32.totalorder %s29, 1
      %p104 = por %p102, %p103
      %p106 = scmp.ne.s32.totalorder %s89, %s105
      %p107 = scmp.eq.s32.totalorder %s29, 0
      %p108 = por %p106, %p107
      %s110 = sadd.s32 %s109, 1
      %p113 = scmp.eq.s32.totalorder %s23, 1
      %p114 = scmp.ne.s32.totalorder %s109, %s111
      %p115 = scmp.eq.s32.totalorder %s23, 0
      %p116 = por %p114, %p115
      %p117 = scmp.ne.s32.totalorder %s109, %s111
      %p118 = scmp.eq.s32.totalorder %s28, 1
      %p119 = por %p117, %p118
      %p120 = scmp.ne.s32.totalorder %s111, %s112
      %p121 = scmp.eq.s32.totalorder %s28, 0
      %p122 = por %p120, %p121
      %p123 = scmp.ne.s32.totalorder %s111, %s112
      %p124 = scmp.eq.s32.totalorder %s29, 1
      %p125 = por %p123, %p124
      %p127 = scmp.ne.s32.totalorder %s112, %s126
      %p128 = scmp.eq.s32.totalorder %s29, 0
      %p129 = por %p127, %p128
      %s131 = sadd.s32 %s130, 1
      %p134 = scmp.eq.s32.totalorder %s23, 1
      %p135 = scmp.ne.s32.totalorder %s130, %s132
      %p136 = scmp.eq.s32.totalorder %s23, 0
      %p137 = por %p135, %p136
      %p138 = scmp.ne.s32.totalorder %s130, %s132
      %p139 = scmp.eq.s32.totalorder %s28, 1
      %p140 = por %p138, %p139
      %p141 = scmp.ne.s32.totalorder %s132, %s133
      %p142 = scmp.eq.s32.totalorder %s28, 0
      %p143 = por %p141, %p142
      %p144 = scmp.ne.s32.totalorder %s132, %s133
      %p145 = scmp.eq.s32.totalorder %s29, 1
      %p146 = por %p144, %p145
      %p148 = scmp.ne.s32.totalorder %s133, %s147
      %p149 = scmp.eq.s32.totalorder %s29, 0
      %p150 = por %p148, %p149
      %s152 = sadd.s32 %s151, 1
      %p155 = scmp.eq.s32.totalorder %s23, 1
      %p156 = scmp.ne.s32.totalorder %s151, %s153
      %p157 = scmp.eq.s32.totalorder %s23, 0
      %p158 = por %p156, %p157
      %p159 = scmp.ne.s32.totalorder %s151, %s153
      %p160 = scmp.eq.s32.totalorder %s28, 1
      %p161 = por %p159, %p160
      %p162 = scmp.ne.s32.totalorder %s153, %s154
      %p163 = scmp.eq.s32.totalorder %s28, 0
      %p164 = por %p162, %p163
      %p165 = scmp.ne.s32.totalorder %s153, %s154
      %p166 = scmp.eq.s32.totalorder %s29, 1
      %p167 = por %p165, %p166
      %p169 = scmp.ne.s32.totalorder %s154, %s168
      %p170 = scmp.eq.s32.totalorder %s29, 0
      %p171 = por %p169, %p170
      %s172 = ssub.s32 %s23, %s30
      %p173 = scmp.eq.s32.totalorder %s172, 0
      %s175 = sadd.s32 %s174, 1
      %s176 = scalar_select %p173, %s174, %s175
      %p179 = pneg %p173
      %p180 = scmp.eq.s32.totalorder %s23, 1
      %p181 = por %p179, %p180
      %p182 = scmp.ne.s32.totalorder %s174, %s177
      %p183 = scmp.eq.s32.totalorder %s23, 0
      %p184 = por %p182, %p183
      %p185 = scmp.ne.s32.totalorder %s174, %s177
      %p186 = scmp.eq.s32.totalorder %s28, 1
      %p187 = por %p185, %p186
      %p188 = scmp.ne.s32.totalorder %s177, %s178
      %p189 = scmp.eq.s32.totalorder %s28, 0
      %p190 = por %p188, %p189
      %p191 = scmp.ne.s32.totalorder %s177, %s178
      %p192 = scmp.eq.s32.totalorder %s29, 1
      %p193 = por %p191, %p192
      %p195 = scmp.ne.s32.totalorder %s178, %s194
      %p196 = scmp.eq.s32.totalorder %s29, 0
      %p197 = por %p195, %p196
      %p198 = scmp.le.s32.totalorder 1, %s23
      %p199 = scmp.lt.s32.totalorder %s23, 3
      %p200 = pnand %p198, %p199
      %p201 = pneg %p200
      // Predicated region
      $region9: #{scaled_dot_product_attention.1} parent=5 // pred_check
        _
      $region10: #{scaled_dot_product_attention.1} parent=5 // pred_check_branch
        %203 = sbr.rel (%p200) target = $region12
      $region11: #{scaled_dot_product_attention.1} parent=5 // pred_region
        %s204 = ssub.s32 %s23, 1
        // Predicated region
        $region13: #{scaled_dot_product_attention.1} parent=11 // pred_check
          %p205 = pneg %p122
        $region14: #{scaled_dot_product_attention.1} parent=11 // pred_check_branch
          %207 = sbr.rel (%p205) target = $region16
        $region15: #{scaled_dot_product_attention.1} parent=11 // pred_region
          %s209 = ssub.s32 512, 512
          %210 = vsyncadd [#allocation9], %s209
          %s211 = sshll.u32 [#allocation8], 4
          %s212 = int_to_ptr.vmem [resolvable:$true] %s211
          %217 = dma.hbm_to_vmem [thread:$0]  %s3, 512, %s212, [#allocation9], 128, 128, 8
        $region16: #{scaled_dot_product_attention.1} parent=11 // pred_fallthru
          _
        // Predicated region
        $region17: #{scaled_dot_product_attention.1} parent=11 // pred_check
          %p218 = pneg %p143
        $region18: #{scaled_dot_product_attention.1} parent=11 // pred_check_branch
          %220 = sbr.rel (%p218) target = $region20
        $region19: #{scaled_dot_product_attention.1} parent=11 // pred_region
          %s222 = ssub.s32 512, 512
          %223 = vsyncadd [#allocation9], %s222
          %s224 = sshll.u32 [#allocation10], 4
          %s225 = int_to_ptr.vmem [resolvable:$true] %s224
          %230 = dma.hbm_to_vmem [thread:$0]  %s4, 512, %s225, [#allocation9], 128, 128, 8
        $region20: #{scaled_dot_product_attention.1} parent=11 // pred_fallthru
          _
        // Predicated region
        $region21: #{scaled_dot_product_attention.1} parent=11 // pred_check
          %p231 = pneg %p164
        $region22: #{scaled_dot_product_attention.1} parent=11 // pred_check_branch
          %233 = sbr.rel (%p231) target = $region24
        $region23: #{scaled_dot_product_attention.1} parent=11 // pred_region
          %s235 = ssub.s32 512, 512
          %236 = vsyncadd [#allocation12], %s235
          %s237 = sshll.u32 [#allocation11], 4
          %s238 = int_to_ptr.vmem [resolvable:$true] %s237
          %243 = dma.hbm_to_vmem [thread:$0]  %s5, 512, %s238, [#allocation12], 128, 128, 8
        $region24: #{scaled_dot_product_attention.1} parent=11 // pred_fallthru
          _
      $region12: #{scaled_dot_product_attention.1} parent=5 // pred_fallthru
        _
      %p244 = scmp.lt.s32.totalorder %s23, 2
      // Predicated region
      $region25: #{scaled_dot_product_attention.1} parent=5 // pred_check
        %p245 = pneg %p244
      $region26: #{scaled_dot_product_attention.1} parent=5 // pred_check_branch
        %247 = sbr.rel (%p245) target = $region28
      $region27: #{scaled_dot_product_attention.1} parent=5 // pred_region
        // Predicated region
        $region29: #{scaled_dot_product_attention.1} parent=27 // pred_check
          %p248 = pneg %p43
        $region30: #{scaled_dot_product_attention.1} parent=27 // pred_check_branch
          %250 = sbr.rel (%p248) target = $region32
        $region31: #{scaled_dot_product_attention.1} parent=27 // pred_region
          %s251 = sand.u32 %s33, 1
          %s252 = scalar_lea.sflag [#allocation3], %s251
          %s253 = sand.u32 %s33, 1
          %s254 = smul.addr %s253, 8
          %s255 = scalar_lea.vmem [#allocation2], %s254
          %s257 = ssub.s32 128, 128
          %258 = vsyncadd %s252, %s257
          %s259 = smul.addr %s23, 128
          %s260 = scalar_lea.hbm %s0, %s259
          %s262 = sshll.u32 %s255, 4
          %s263 = int_to_ptr.vmem [resolvable:$true] %s262
          %265 = dma.hbm_to_vmem [thread:$0]  %s260, 128, %s263, %s252
        $region32: #{scaled_dot_product_attention.1} parent=27 // pred_fallthru
          _
        // Predicated region
        $region33: #{scaled_dot_product_attention.1} parent=27 // pred_check
          %p266 = pneg %p69
        $region34: #{scaled_dot_product_attention.1} parent=27 // pred_check_branch
          %268 = sbr.rel (%p266) target = $region36
        $region35: #{scaled_dot_product_attention.1} parent=27 // pred_region
          %s269 = sand.u32 %s23, 1
          %s270 = scalar_lea.sflag [#allocation6], %s269
          %s271 = sand.u32 %s59, 1
          %s272 = smul.addr %s271, 8
          %s273 = scalar_lea.vmem [#allocation5], %s272
          %s275 = ssub.s32 128, 128
          %276 = vsyncadd %s270, %s275
          %s277 = smul.addr %s23, 128
          %s278 = scalar_lea.hbm %s1, %s277
          %s280 = sshll.u32 %s273, 4
          %s281 = int_to_ptr.vmem [resolvable:$true] %s280
          %283 = dma.hbm_to_vmem [thread:$0]  %s278, 128, %s281, %s270
        $region36: #{scaled_dot_product_attention.1} parent=27 // pred_fallthru
          _
        // Predicated region
        $region37: #{scaled_dot_product_attention.1} parent=27 // pred_check
          %p284 = pneg %p95
        $region38: #{scaled_dot_product_attention.1} parent=27 // pred_check_branch
          %286 = sbr.rel (%p284) target = $region40
        $region39: #{scaled_dot_product_attention.1} parent=27 // pred_region
          %s287 = sand.u32 %s23, 1
          %s288 = scalar_lea.sflag [#allocation6], %s287
          %s289 = sand.u32 %s85, 1
          %s290 = smul.addr %s289, 8
          %s291 = scalar_lea.vmem [#allocation7], %s290
          %s293 = ssub.s32 128, 128
          %294 = vsyncadd %s288, %s293
          %s295 = smul.addr %s23, 128
          %s296 = scalar_lea.hbm %s2, %s295
          %s298 = sshll.u32 %s291, 4
          %s299 = int_to_ptr.vmem [resolvable:$true] %s298
          %301 = dma.hbm_to_vmem [thread:$0]  %s296, 128, %s299, %s288
        $region40: #{scaled_dot_product_attention.1} parent=27 // pred_fallthru
          _
      $region28: #{scaled_dot_product_attention.1} parent=5 // pred_fallthru
        _
      %p302 = scmp.le.s32.totalorder 1, %s23
      %p303 = scmp.lt.s32.totalorder %s23, 3
      %p304 = pnand %p302, %p303
      %p305 = pneg %p304
      // Predicated region
      $region41: #{scaled_dot_product_attention.1} parent=5 // pred_check
        _
      $region42: #{scaled_dot_product_attention.1} parent=5 // pred_check_branch
        %307 = sbr.rel (%p304) target = $region44
      $region43: #{scaled_dot_product_attention.1} parent=5 // pred_region
        %s308 = ssub.s32 %s23, 1
        %s309 = sand.u32 %s36, 1
        %s310 = scalar_lea.sflag [#allocation3], %s309
        %s311 = sand.u32 %s36, 1
        %s312 = smul.addr %s311, 8
        %s313 = scalar_lea.vmem [#allocation2], %s312
        // Predicated region
        $region45: #{scaled_dot_product_attention.1} parent=43 // pred_check
          %p314 = pneg %p49
        $region46: #{scaled_dot_product_attention.1} parent=43 // pred_check_branch
          %316 = sbr.rel (%p314) target = $region48
        $region47: #{scaled_dot_product_attention.1} parent=43 // pred_region
          %317 = dma.done %s310, 128
        $region48: #{scaled_dot_product_attention.1} parent=43 // pred_fallthru
          _
        %s318 = sand.u32 %s28, 1
        %s319 = scalar_lea.sflag [#allocation6], %s318
        %s320 = sand.u32 %s62, 1
        %s321 = smul.addr %s320, 8
        %s322 = scalar_lea.vmem [#allocation5], %s321
        // Predicated region
        $region49: #{scaled_dot_product_attention.1} parent=43 // pred_check
          %p323 = pneg %p75
        $region50: #{scaled_dot_product_attention.1} parent=43 // pred_check_branch
          %325 = sbr.rel (%p323) target = $region52
        $region51: #{scaled_dot_product_attention.1} parent=43 // pred_region
          %326 = dma.done %s319, 128
        $region52: #{scaled_dot_product_attention.1} parent=43 // pred_fallthru
          _
        %s327 = sand.u32 %s28, 1
        %s328 = scalar_lea.sflag [#allocation6], %s327
        %s329 = sand.u32 %s88, 1
        %s330 = smul.addr %s329, 8
        %s331 = scalar_lea.vmem [#allocation7], %s330
        // Predicated region
        $region53: #{scaled_dot_product_attention.1} parent=43 // pred_check
          %p332 = pneg %p101
        $region54: #{scaled_dot_product_attention.1} parent=43 // pred_check_branch
          %334 = sbr.rel (%p332) target = $region56
        $region55: #{scaled_dot_product_attention.1} parent=43 // pred_region
          %335 = dma.done %s328, 128
        $region56: #{scaled_dot_product_attention.1} parent=43 // pred_fallthru
          _
        // Predicated region
        $region57: #{scaled_dot_product_attention.1} parent=43 // pred_check
          %p336 = pneg %p122
        $region58: #{scaled_dot_product_attention.1} parent=43 // pred_check_branch
          %338 = sbr.rel (%p336) target = $region60
        $region59: #{scaled_dot_product_attention.1} parent=43 // pred_region
          %339 = dma.done [#allocation9], 512
        $region60: #{scaled_dot_product_attention.1} parent=43 // pred_fallthru
          _
        // Predicated region
        $region61: #{scaled_dot_product_attention.1} parent=43 // pred_check
          %p340 = pneg %p143
        $region62: #{scaled_dot_product_attention.1} parent=43 // pred_check_branch
          %342 = sbr.rel (%p340) target = $region64
        $region63: #{scaled_dot_product_attention.1} parent=43 // pred_region
          %343 = dma.done [#allocation9], 512
        $region64: #{scaled_dot_product_attention.1} parent=43 // pred_fallthru
          _
        // Predicated region
        $region65: #{scaled_dot_product_attention.1} parent=43 // pred_check
          %p344 = pneg %p164
        $region66: #{scaled_dot_product_attention.1} parent=43 // pred_check_branch
          %346 = sbr.rel (%p344) target = $region68
        $region67: #{scaled_dot_product_attention.1} parent=43 // pred_region
          %347 = dma.done [#allocation12], 512
        $region68: #{scaled_dot_product_attention.1} parent=43 // pred_fallthru
          _
        %s348 = sand.u32 %s36, 1
        %s349 = scalar_lea.sflag [#allocation3], %s348
        %s350 = sand.u32 %s36, 1
        %s351 = smul.addr %s350, 8
        %s352 = scalar_lea.vmem [#allocation2], %s351
        %p353 = pneg %p49
        %p354 = pneg %p46
        %s355 = sand.u32 %s28, 1
        %s356 = scalar_lea.sflag [#allocation6], %s355
        %s357 = sand.u32 %s62, 1
        %s358 = smul.addr %s357, 8
        %s359 = scalar_lea.vmem [#allocation5], %s358
        %p360 = pneg %p75
        %p361 = pneg %p72
        %s362 = sand.u32 %s28, 1
        %s363 = scalar_lea.sflag [#allocation6], %s362
        %s364 = sand.u32 %s88, 1
        %s365 = smul.addr %s364, 8
        %s366 = scalar_lea.vmem [#allocation7], %s365
        %p367 = pneg %p101
        %p368 = pneg %p98
        %p369 = pneg %p122
        %p370 = pneg %p119
        %p371 = pneg %p143
        %p372 = pneg %p140
        %p373 = pneg %p164
        %p374 = pneg %p161
        %p375 = pneg %p190
        %p376 = pneg %p187
        %s377 = sand.u32 %s177, 1
        %s378 = scalar_lea.sflag [#allocation4], %s377
        %s379 = sand.u32 %s177, 1
        %s380 = smul.addr %s379, 8
        %s381 = scalar_lea.vmem [#allocation13], %s380
        %v382 = vld [vmem:[%s313] sm:$0xff]
        %v383 = vld [vmem:[%s322] sm:$0xff]
        %v384 = vld [vmem:[%s331] sm:$0xff]
        %v385 = vld [vmem:[#allocation8] sm:$0xff]
        %v386 = vld [vmem:[#allocation8 + $0x8] sm:$0xff]
        %v387 = vld [vmem:[#allocation8 + $0x10] sm:$0xff]
        %v388 = vld [vmem:[#allocation8 + $0x18] sm:$0xff]
        %v389 = vld [vmem:[#allocation10] sm:$0xff]
        %v390 = vld [vmem:[#allocation10 + $0x8] sm:$0xff]
        %v391 = vld [vmem:[#allocation10 + $0x10] sm:$0xff]
        %v392 = vld [vmem:[#allocation10 + $0x18] sm:$0xff]
        %v393 = vld [vmem:[#allocation11] sm:$0xff]
        %v394 = vld [vmem:[#allocation11 + $0x8] sm:$0xff]
        %v395 = vld [vmem:[#allocation11 + $0x10] sm:$0xff]
        %v396 = vld [vmem:[#allocation11 + $0x18] sm:$0xff]
        %vm397 = vcmask 261120
        %v399 = vsel %vm397, %v382, 0
        %401 = vmatprep.subr.mxu0 0.0
        %402 = vmatpush1.msra.mxu0 %v385
        %403 = vmatprep.subr.mxu0 0.0
        %404 = vmatpush1.msra.mxu0 %v386
        %405 = vmatprep.subr.mxu0 0.0
        %406 = vmatpush1.msra.mxu0 %v387
        %407 = vmatprep.subr.mxu0 0.0
        %408 = vmatpush1.msra.mxu0 %v388
        %409 = vmatprep.subr.mxu0 0.0
        %410 = vmatpush1.msra.mxu0 0.0
        %411 = vmatprep.subr.mxu0 0.0
        %412 = vmatpush1.msra.mxu0 0.0
        %413 = vmatprep.subr.mxu0 0.0
        %414 = vmatpush1.msra.mxu0 0.0
        %415 = vmatprep.subr.mxu0 0.0
        %416 = vmatpush1.msra.mxu0 0.0
        %417 = vmatprep.subr.mxu0 0.0
        %418 = vmatpush1.msra.mxu0 0.0
        %419 = vmatprep.subr.mxu0 0.0
        %420 = vmatpush1.msra.mxu0 0.0
        %421 = vmatprep.subr.mxu0 0.0
        %422 = vmatpush1.msra.mxu0 0.0
        %423 = vmatprep.subr.mxu0 0.0
        %424 = vmatpush1.msra.mxu0 0.0
        %425 = vmatprep.subr.mxu0 0.0
        %426 = vmatpush1.msra.mxu0 0.0
        %427 = vmatprep.subr.mxu0 0.0
        %428 = vmatpush1.msra.mxu0 0.0
        %429 = vmatprep.subr.mxu0 0.0
        %430 = vmatpush1.msra.mxu0 0.0
        %431 = vmatprep.subr.mxu0 0.0
        %432 = vmatpush1.msra.mxu0 0.0
        %433 = vmatprep.subr.mxu0 0.0
        %434 = vmatpush1.msra.mxu0 0.0
        %435 = vmatprep.subr.mxu0 0.0
        %436 = vmatpush1.msra.mxu0 0.0
        %437 = vmatprep.subr.mxu0 0.0
        %438 = vmatpush1.msra.mxu0 0.0
        %439 = vmatprep.subr.mxu0 0.0
        %440 = vmatpush1.msra.mxu0 0.0
        %441 = vmatprep.subr.mxu0 0.0
        %442 = vmatpush1.msra.mxu0 0.0
        %443 = vmatprep.subr.mxu0 0.0
        %444 = vmatpush1.msra.mxu0 0.0
        %445 = vmatprep.subr.mxu0 0.0
        %446 = vmatpush1.msra.mxu0 0.0
        %447 = vmatprep.subr.mxu0 0.0
        %448 = vmatpush1.msra.mxu0 0.0
        %449 = vmatprep.subr.mxu0 0.0
        %450 = vmatpush1.msra.mxu0 0.0
        %451 = vmatprep.subr.mxu0 0.0
        %452 = vmatpush1.msra.mxu0 0.0
        %453 = vmatprep.subr.mxu0 0.0
        %454 = vmatpush1.msra.mxu0 0.0
        %455 = vmatprep.subr.mxu0 0.0
        %456 = vmatpush1.msra.mxu0 0.0
        %457 = vmatprep.subr.mxu0 0.0
        %458 = vmatpush1.msra.mxu0 0.0
        %459 = vmatprep.subr.mxu0 0.0
        %460 = vmatpush1.msra.mxu0 0.0
        %461 = vmatprep.subr.mxu0 0.0
        %462 = vmatpush1.msra.mxu0 0.0
        %463 = vmatprep.subr.mxu0 0.0
        %464 = vmatpush1.msra.mxu0 0.0
        %465 = vmatprep.mubr.f32.mxu0 0.0
        %466 = vmatmul.mubr.f32.gmra.mrb[0].mxu0 %v399
        %v467 = vpop.f32.mrb[0].mxu0
        %v468 = vadd.f32 0.0, %v467
        %v469 = vpop.f32.mrb[0].mxu0
        %470 = vdwg.mxu0
        %v472 = vsel %vm397, %v383, 0
        %474 = vmatprep.subr.mxu0 0.0
        %475 = vmatpush1.msra.mxu0 %v389
        %476 = vmatprep.subr.mxu0 0.0
        %477 = vmatpush1.msra.mxu0 %v390
        %478 = vmatprep.subr.mxu0 0.0
        %479 = vmatpush1.msra.mxu0 %v391
        %480 = vmatprep.subr.mxu0 0.0
        %481 = vmatpush1.msra.mxu0 %v392
        %482 = vmatprep.subr.mxu0 0.0
        %483 = vmatpush1.msra.mxu0 0.0
        %484 = vmatprep.subr.mxu0 0.0
        %485 = vmatpush1.msra.mxu0 0.0
        %486 = vmatprep.subr.mxu0 0.0
        %487 = vmatpush1.msra.mxu0 0.0
        %488 = vmatprep.subr.mxu0 0.0
        %489 = vmatpush1.msra.mxu0 0.0
        %490 = vmatprep.subr.mxu0 0.0
        %491 = vmatpush1.msra.mxu0 0.0
        %492 = vmatprep.subr.mxu0 0.0
        %493 = vmatpush1.msra.mxu0 0.0
        %494 = vmatprep.subr.mxu0 0.0
        %495 = vmatpush1.msra.mxu0 0.0
        %496 = vmatprep.subr.mxu0 0.0
        %497 = vmatpush1.msra.mxu0 0.0
        %498 = vmatprep.subr.mxu0 0.0
        %499 = vmatpush1.msra.mxu0 0.0
        %500 = vmatprep.subr.mxu0 0.0
        %501 = vmatpush1.msra.mxu0 0.0
        %502 = vmatprep.subr.mxu0 0.0
        %503 = vmatpush1.msra.mxu0 0.0
        %504 = vmatprep.subr.mxu0 0.0
        %505 = vmatpush1.msra.mxu0 0.0
        %506 = vmatprep.subr.mxu0 0.0
        %507 = vmatpush1.msra.mxu0 0.0
        %508 = vmatprep.subr.mxu0 0.0
        %509 = vmatpush1.msra.mxu0 0.0
        %510 = vmatprep.subr.mxu0 0.0
        %511 = vmatpush1.msra.mxu0 0.0
        %512 = vmatprep.subr.mxu0 0.0
        %513 = vmatpush1.msra.mxu0 0.0
        %514 = vmatprep.subr.mxu0 0.0
        %515 = vmatpush1.msra.mxu0 0.0
        %516 = vmatprep.subr.mxu0 0.0
        %517 = vmatpush1.msra.mxu0 0.0
        %518 = vmatprep.subr.mxu0 0.0
        %519 = vmatpush1.msra.mxu0 0.0
        %520 = vmatprep.subr.mxu0 0.0
        %521 = vmatpush1.msra.mxu0 0.0
        %522 = vmatprep.subr.mxu0 0.0
        %523 = vmatpush1.msra.mxu0 0.0
        %524 = vmatprep.subr.mxu0 0.0
        %525 = vmatpush1.msra.mxu0 0.0
        %526 = vmatprep.subr.mxu0 0.0
        %527 = vmatpush1.msra.mxu0 0.0
        %528 = vmatprep.subr.mxu0 0.0
        %529 = vmatpush1.msra.mxu0 0.0
        %530 = vmatprep.subr.mxu0 0.0
        %531 = vmatpush1.msra.mxu0 0.0
        %532 = vmatprep.subr.mxu0 0.0
        %533 = vmatpush1.msra.mxu0 0.0
        %534 = vmatprep.subr.mxu0 0.0
        %535 = vmatpush1.msra.mxu0 0.0
        %536 = vmatprep.subr.mxu0 0.0
        %537 = vmatpush1.msra.mxu0 0.0
        %538 = vmatprep.mubr.f32.mxu0 0.0
        %539 = vmatmul.mubr.f32.gmra.mrb[0].mxu0 %v472
        %v540 = vpop.f32.mrb[0].mxu0
        %v541 = vadd.f32 0.0, %v540
        %v542 = vpop.f32.mrb[0].mxu0
        %543 = vdwg.mxu0
        %v545 = vsel %vm397, %v384, 0
        %547 = vmatprep.subr.mxu0 0.0
        %548 = vmatpush1.msra.mxu0 %v393
        %549 = vmatprep.subr.mxu0 0.0
        %550 = vmatpush1.msra.mxu0 %v394
        %551 = vmatprep.subr.mxu0 0.0
        %552 = vmatpush1.msra.mxu0 %v395
        %553 = vmatprep.subr.mxu0 0.0
        %554 = vmatpush1.msra.mxu0 %v396
        %555 = vmatprep.subr.mxu0 0.0
        %556 = vmatpush1.msra.mxu0 0.0
        %557 = vmatprep.subr.mxu0 0.0
        %558 = vmatpush1.msra.mxu0 0.0
        %559 = vmatprep.subr.mxu0 0.0
        %560 = vmatpush1.msra.mxu0 0.0
        %561 = vmatprep.subr.mxu0 0.0
        %562 = vmatpush1.msra.mxu0 0.0
        %563 = vmatprep.subr.mxu0 0.0
        %564 = vmatpush1.msra.mxu0 0.0
        %565 = vmatprep.subr.mxu0 0.0
        %566 = vmatpush1.msra.mxu0 0.0
        %567 = vmatprep.subr.mxu0 0.0
        %568 = vmatpush1.msra.mxu0 0.0
        %569 = vmatprep.subr.mxu0 0.0
        %570 = vmatpush1.msra.mxu0 0.0
        %571 = vmatprep.subr.mxu0 0.0
        %572 = vmatpush1.msra.mxu0 0.0
        %573 = vmatprep.subr.mxu0 0.0
        %574 = vmatpush1.msra.mxu0 0.0
        %575 = vmatprep.subr.mxu0 0.0
        %576 = vmatpush1.msra.mxu0 0.0
        %577 = vmatprep.subr.mxu0 0.0
        %578 = vmatpush1.msra.mxu0 0.0
        %579 = vmatprep.subr.mxu0 0.0
        %580 = vmatpush1.msra.mxu0 0.0
        %581 = vmatprep.subr.mxu0 0.0
        %582 = vmatpush1.msra.mxu0 0.0
        %583 = vmatprep.subr.mxu0 0.0
        %584 = vmatpush1.msra.mxu0 0.0
        %585 = vmatprep.subr.mxu0 0.0
        %586 = vmatpush1.msra.mxu0 0.0
        %587 = vmatprep.subr.mxu0 0.0
        %588 = vmatpush1.msra.mxu0 0.0
        %589 = vmatprep.subr.mxu0 0.0
        %590 = vmatpush1.msra.mxu0 0.0
        %591 = vmatprep.subr.mxu0 0.0
        %592 = vmatpush1.msra.mxu0 0.0
        %593 = vmatprep.subr.mxu0 0.0
        %594 = vmatpush1.msra.mxu0 0.0
        %595 = vmatprep.subr.mxu0 0.0
        %596 = vmatpush1.msra.mxu0 0.0
        %597 = vmatprep.subr.mxu0 0.0
        %598 = vmatpush1.msra.mxu0 0.0
        %599 = vmatprep.subr.mxu0 0.0
        %600 = vmatpush1.msra.mxu0 0.0
        %601 = vmatprep.subr.mxu0 0.0
        %602 = vmatpush1.msra.mxu0 0.0
        %603 = vmatprep.subr.mxu0 0.0
        %604 = vmatpush1.msra.mxu0 0.0
        %605 = vmatprep.subr.mxu0 0.0
        %606 = vmatpush1.msra.mxu0 0.0
        %607 = vmatprep.subr.mxu0 0.0
        %608 = vmatpush1.msra.mxu0 0.0
        %609 = vmatprep.subr.mxu0 0.0
        %610 = vmatpush1.msra.mxu0 0.0
        %611 = vmatprep.mubr.f32.mxu0 0.0
        %612 = vmatmul.mubr.f32.gmra.mrb[0].mxu0 %v545
        %v613 = vpop.f32.mrb[0].mxu0
        %v614 = vadd.f32 0.0, %v613
        %v615 = vpop.f32.mrb[0].mxu0
        %616 = vdwg.mxu0
        %v617 = vmul.f32 %v468, 0.17677669
        %v619 = vsel %vm397, %v617, 0
        %v622 = vsel %vm397, %v541, 0
        %624 = vmatprep.subr.mxu0 0.0
        %625 = vmatpush1.xpose.msra.mxu0 %v622
        %626 = vmatprep.subr.mxu0 0.0
        %627 = vmatpush1.xpose.msra.mxu0 0.0
        %628 = vmatprep.subr.mxu0 0.0
        %629 = vmatpush1.xpose.msra.mxu0 0.0
        %630 = vmatprep.subr.mxu0 0.0
        %631 = vmatpush1.xpose.msra.mxu0 0.0
        %632 = vmatprep.subr.mxu0 0.0
        %633 = vmatpush1.xpose.msra.mxu0 0.0
        %634 = vmatprep.subr.mxu0 0.0
        %635 = vmatpush1.xpose.msra.mxu0 0.0
        %636 = vmatprep.subr.mxu0 0.0
        %637 = vmatpush1.xpose.msra.mxu0 0.0
        %638 = vmatprep.subr.mxu0 0.0
        %639 = vmatpush1.xpose.msra.mxu0 0.0
        %640 = vmatprep.subr.mxu0 0.0
        %641 = vmatpush1.xpose.msra.mxu0 0.0
        %642 = vmatprep.subr.mxu0 0.0
        %643 = vmatpush1.xpose.msra.mxu0 0.0
        %644 = vmatprep.subr.mxu0 0.0
        %645 = vmatpush1.xpose.msra.mxu0 0.0
        %646 = vmatprep.subr.mxu0 0.0
        %647 = vmatpush1.xpose.msra.mxu0 0.0
        %648 = vmatprep.subr.mxu0 0.0
        %649 = vmatpush1.xpose.msra.mxu0 0.0
        %650 = vmatprep.subr.mxu0 0.0
        %651 = vmatpush1.xpose.msra.mxu0 0.0
        %652 = vmatprep.subr.mxu0 0.0
        %653 = vmatpush1.xpose.msra.mxu0 0.0
        %654 = vmatprep.subr.mxu0 0.0
        %655 = vmatpush1.xpose.msra.mxu0 0.0
        %656 = vmatprep.subr.mxu0 0.0
        %657 = vmatpush1.xpose.msra.mxu0 0.0
        %658 = vmatprep.subr.mxu0 0.0
        %659 = vmatpush1.xpose.msra.mxu0 0.0
        %660 = vmatprep.subr.mxu0 0.0
        %661 = vmatpush1.xpose.msra.mxu0 0.0
        %662 = vmatprep.subr.mxu0 0.0
        %663 = vmatpush1.xpose.msra.mxu0 0.0
        %664 = vmatprep.subr.mxu0 0.0
        %665 = vmatpush1.xpose.msra.mxu0 0.0
        %666 = vmatprep.subr.mxu0 0.0
        %667 = vmatpush1.xpose.msra.mxu0 0.0
        %668 = vmatprep.subr.mxu0 0.0
        %669 = vmatpush1.xpose.msra.mxu0 0.0
        %670 = vmatprep.subr.mxu0 0.0
        %671 = vmatpush1.xpose.msra.mxu0 0.0
        %672 = vmatprep.subr.mxu0 0.0
        %673 = vmatpush1.xpose.msra.mxu0 0.0
        %674 = vmatprep.subr.mxu0 0.0
        %675 = vmatpush1.xpose.msra.mxu0 0.0
        %676 = vmatprep.subr.mxu0 0.0
        %677 = vmatpush1.xpose.msra.mxu0 0.0
        %678 = vmatprep.subr.mxu0 0.0
        %679 = vmatpush1.xpose.msra.mxu0 0.0
        %680 = vmatprep.subr.mxu0 0.0
        %681 = vmatpush1.xpose.msra.mxu0 0.0
        %682 = vmatprep.subr.mxu0 0.0
        %683 = vmatpush1.xpose.msra.mxu0 0.0
        %684 = vmatprep.subr.mxu0 0.0
        %685 = vmatpush1.xpose.msra.mxu0 0.0
        %686 = vmatprep.subr.mxu0 0.0
        %687 = vmatpush1.xpose.msra.mxu0 0.0
        %688 = vmatprep.mubr.f32.mxu0 0.0
        %689 = vmatmul.mubr.f32.gmra.mrb[0].mxu0 %v619
        %v690 = vpop.f32.mrb[0].mxu0
        %v691 = vadd.f32 0.0, %v690
        %v692 = vpop.f32.mrb[0].mxu0
        %693 = vdwg.mxu0
        %vm694 = vcmask 64512
        %v695 = vsel %vm694, %v691, -inf
        %696 = vmax.xlane.f32.xlu0 %v695
        %v697 = vpop.xlane.xlu0 %696
        %v698 = vsub.f32 %v691, %v697
        %v699 = vmul.f32 %v698, 1.442695
        %v700 = vpow.pop %v699
        %v701 = vsel %vm694, %v700, 0.0
        %702 = vadd.xlane.f32.xlu0 %v701
        %v703 = vpop.xlane.xlu0 %702
        %v704 = vrcp.pop %v703
        %v705 = vmul.f32 %v700, %v704
        %v707 = vsel %vm694, %v705, 0
        %709 = vmatprep.subr.mxu0 0.0
        %710 = vmatpush1.msra.mxu0 %v614
        %711 = vmatprep.subr.mxu0 0.0
        %712 = vmatpush1.msra.mxu0 0.0
        %713 = vmatprep.subr.mxu0 0.0
        %714 = vmatpush1.msra.mxu0 0.0
        %715 = vmatprep.subr.mxu0 0.0
        %716 = vmatpush1.msra.mxu0 0.0
        %717 = vmatprep.subr.mxu0 0.0
        %718 = vmatpush1.msra.mxu0 0.0
        %719 = vmatprep.subr.mxu0 0.0
        %720 = vmatpush1.msra.mxu0 0.0
        %721 = vmatprep.subr.mxu0 0.0
        %722 = vmatpush1.msra.mxu0 0.0
        %723 = vmatprep.subr.mxu0 0.0
        %724 = vmatpush1.msra.mxu0 0.0
        %725 = vmatprep.subr.mxu0 0.0
        %726 = vmatpush1.msra.mxu0 0.0
        %727 = vmatprep.subr.mxu0 0.0
        %728 = vmatpush1.msra.mxu0 0.0
        %729 = vmatprep.subr.mxu0 0.0
        %730 = vmatpush1.msra.mxu0 0.0
        %731 = vmatprep.subr.mxu0 0.0
        %732 = vmatpush1.msra.mxu0 0.0
        %733 = vmatprep.subr.mxu0 0.0
        %734 = vmatpush1.msra.mxu0 0.0
        %735 = vmatprep.subr.mxu0 0.0
        %736 = vmatpush1.msra.mxu0 0.0
        %737 = vmatprep.subr.mxu0 0.0
        %738 = vmatpush1.msra.mxu0 0.0
        %739 = vmatprep.subr.mxu0 0.0
        %740 = vmatpush1.msra.mxu0 0.0
        %741 = vmatprep.subr.mxu0 0.0
        %742 = vmatpush1.msra.mxu0 0.0
        %743 = vmatprep.subr.mxu0 0.0
        %744 = vmatpush1.msra.mxu0 0.0
        %745 = vmatprep.subr.mxu0 0.0
        %746 = vmatpush1.msra.mxu0 0.0
        %747 = vmatprep.subr.mxu0 0.0
        %748 = vmatpush1.msra.mxu0 0.0
        %749 = vmatprep.subr.mxu0 0.0
        %750 = vmatpush1.msra.mxu0 0.0
        %751 = vmatprep.subr.mxu0 0.0
        %752 = vmatpush1.msra.mxu0 0.0
        %753 = vmatprep.subr.mxu0 0.0
        %754 = vmatpush1.msra.mxu0 0.0
        %755 = vmatprep.subr.mxu0 0.0
        %756 = vmatpush1.msra.mxu0 0.0
        %757 = vmatprep.subr.mxu0 0.0
        %758 = vmatpush1.msra.mxu0 0.0
        %759 = vmatprep.subr.mxu0 0.0
        %760 = vmatpush1.msra.mxu0 0.0
        %761 = vmatprep.subr.mxu0 0.0
        %762 = vmatpush1.msra.mxu0 0.0
        %763 = vmatprep.subr.mxu0 0.0
        %764 = vmatpush1.msra.mxu0 0.0
        %765 = vmatprep.subr.mxu0 0.0
        %766 = vmatpush1.msra.mxu0 0.0
        %767 = vmatprep.subr.mxu0 0.0
        %768 = vmatpush1.msra.mxu0 0.0
        %769 = vmatprep.subr.mxu0 0.0
        %770 = vmatpush1.msra.mxu0 0.0
        %771 = vmatprep.subr.mxu0 0.0
        %772 = vmatpush1.msra.mxu0 0.0
        %773 = vmatprep.mubr.f32.mxu0 0.0
        %774 = vmatmul.mubr.f32.gmra.mrb[0].mxu0 %v707
        %v775 = vpop.f32.mrb[0].mxu0
        %v776 = vadd.f32 0.0, %v775
        %v777 = vpop.f32.mrb[0].mxu0
        %778 = vdwg.mxu0
        %779 = vst.msk [vmem:[%s381] sm:$0xff] %vm397, %v776
        %s780 = sand.u32 %s177, 1
        %s781 = scalar_lea.sflag [#allocation4], %s780
        %s782 = sand.u32 %s177, 1
        %s783 = smul.addr %s782, 8
        %s784 = scalar_lea.vmem [#allocation13], %s783
        // Predicated region
        $region69: #{scaled_dot_product_attention.1} parent=43 // pred_check
          %p785 = pneg %p187
        $region70: #{scaled_dot_product_attention.1} parent=43 // pred_check_branch
          %787 = sbr.rel (%p785) target = $region72
        $region71: #{scaled_dot_product_attention.1} parent=43 // pred_region
          %s789 = ssub.s32 128, 128
          %790 = vsyncadd %s781, %s789
          %s791 = smul.addr %s28, 128
          %s792 = scalar_lea.hbm %s6, %s791
          %s794 = sshll.u32 %s784, 4
          %s795 = int_to_ptr.vmem [resolvable:$true] %s794
          %797 = dma.vmem_to_hbm [thread:$0]  %s795, 128, %s792, %s781
        $region72: #{scaled_dot_product_attention.1} parent=43 // pred_fallthru
          _
      $region44: #{scaled_dot_product_attention.1} parent=5 // pred_fallthru
        _
      %p798 = scmp.le.s32.totalorder 2, %s23
      // Predicated region
      $region73: #{scaled_dot_product_attention.1} parent=5 // pred_check
        %p799 = pneg %p798
      $region74: #{scaled_dot_product_attention.1} parent=5 // pred_check_branch
        %801 = sbr.rel (%p799) target = $region76
      $region75: #{scaled_dot_product_attention.1} parent=5 // pred_region
        %s802 = ssub.s32 %s23, 2
        // Predicated region
        $region77: #{scaled_dot_product_attention.1} parent=75 // pred_check
          %p803 = pneg %p193
        $region78: #{scaled_dot_product_attention.1} parent=75 // pred_check_branch
          %805 = sbr.rel (%p803) target = $region80
        $region79: #{scaled_dot_product_attention.1} parent=75 // pred_region
          %s806 = sand.u32 %s178, 1
          %s807 = scalar_lea.sflag [#allocation4], %s806
          %s808 = sand.u32 %s178, 1
          %s809 = smul.addr %s808, 8
          %s810 = scalar_lea.vmem [#allocation13], %s809
          %811 = dma.done %s807, 128
        $region80: #{scaled_dot_product_attention.1} parent=75 // pred_fallthru
          _
      $region76: #{scaled_dot_product_attention.1} parent=5 // pred_fallthru
        _
    $region6: #{scaled_dot_product_attention.1} parent=1 // loop_footer
      %s27 = sadd.s32 1, %s23
    $region7: #{scaled_dot_product_attention.1} parent=1 // loop_footer_branch
      %22 = sbr.rel target = $region3
    $region8: #{scaled_dot_product_attention.1} parent=1 // loop_exit
      _
    %812 = vsyncpa [#allocation3], 1
    %s813 = scalar_lea.sflag [#allocation3], 1
    %814 = vsyncpa %s813, 1
    %815 = vsyncpa [#allocation6], 1
    %s816 = scalar_lea.sflag [#allocation6], 1
    %817 = vsyncpa %s816, 1
    %818 = vsyncpa [#allocation9], 1
    %819 = vsyncpa [#allocation12], 1
    %820 = vsyncpa [#allocation4], 1
    %s821 = scalar_lea.sflag [#allocation4], 1
    %822 = vsyncpa %s821, 1

</llo_original>
